<compile_context>
chip_gen: v6e
topology: v6e:2x2x1
jax: 0.10.0
libtpu: 0.0.40
codegen_flags: <defaults>
</compile_context>

<pallas_src>
import functools

import jax
import jax.numpy as jnp
from jax.experimental import pallas as pl
from jax.experimental.pallas import tpu as pltpu


def _weighted_l1_kernel(out_ref, tgt_ref, hm_ref, loss_ref, acc_ref):
    """Per-batch-row softmax(heatmap) weights applied to |o - t|, summed.

    Block shapes: out/tgt (Bt, C, HW), hm (Bt, 1, HW).  Grid axis 0 iterates
    over batch tiles; acc_ref is a (1, 1) f32 VMEM accumulator and the scalar
    output is written only on the final step (no per-step output RMW).
    """
    step = pl.program_id(0)

    @pl.when(step == 0)
    def _init():
        acc_ref[...] = jnp.zeros_like(acc_ref)

    o = out_ref[...].astype(jnp.float32)   # (Bt, C, HW)
    t = tgt_ref[...].astype(jnp.float32)   # (Bt, C, HW)
    h = hm_ref[...].astype(jnp.float32)    # (Bt, 1, HW)

    # Numerically stable softmax per batch row (lane-axis reductions -> XLU).
    m = jnp.max(h, axis=-1, keepdims=True)          # (Bt, 1, 1)
    e = jnp.exp(h - m)                              # (Bt, 1, HW) -> EUP
    denom = jnp.sum(e, axis=-1, keepdims=True)      # (Bt, 1, 1)
    w = e * pl.reciprocal(denom, approx=False)      # exact; denom >= 1

    # sum_{b,c,hw} |o - t| * softmax(heatmap); weights broadcast over C.
    acc_ref[...] += jnp.sum(jnp.abs(o - t) * w)

    @pl.when(step == pl.num_programs(0) - 1)
    def _final():
        loss_ref[...] = acc_ref[...]


def _mean_l1_kernel(out_ref, tgt_ref, loss_ref, acc_ref, *, inv_numel):
    """mean(|o - t|) accumulated over the batch-tile grid axis."""
    step = pl.program_id(0)

    @pl.when(step == 0)
    def _init():
        acc_ref[...] = jnp.zeros_like(acc_ref)

    o = out_ref[...].astype(jnp.float32)
    t = tgt_ref[...].astype(jnp.float32)
    acc_ref[...] += jnp.sum(jnp.abs(o - t))

    @pl.when(step == pl.num_programs(0) - 1)
    def _final():
        loss_ref[...] = acc_ref[...] * inv_numel


def _round_up(x, m):
    return -(-x // m) * m


def _choose_batch_tile(n, c, hw, itemsize, with_heatmap):
    """Batch elements per grid step, sized by the *padded* VMEM footprint.

    VMEM tiles pad the second-to-last dim to 8 sublanes and the last dim to
    128 lanes.  With double buffering (x2) the working set stays around
    ~24 MiB, comfortably under the 32 MiB default scoped-VMEM limit.
    """
    lanes = _round_up(hw, 128)
    per_b = 2 * _round_up(c, 8) * lanes * itemsize          # output + target
    if with_heatmap:
        per_b += 8 * lanes * 4                              # (bt,1,HW) f32, padded to 8 sublanes
    budget = 12 * 1024 * 1024                               # x2 pipeline buffers ~= 24 MiB
    # TODO(synk): if a single batch element alone exceeds the budget (very
    # large C*H*W), this degrades to bt=1 instead of tiling inside an element.
    return int(max(1, min(n, budget // max(per_b, 1))))


def weighted_l1_loss(output, target, heatmap=None, size=(16, 16)):
    """JAX/Pallas equivalent of WeightedL1Loss(size).forward(output, target, heatmap)."""
    N, C, H, W = output.shape
    assert target.shape == output.shape
    HW = H * W

    # Lane-dense layout: the H*W axis maps onto the 128-lane axis.
    out_f = output.reshape(N, C, HW)
    tgt_f = target.reshape(N, C, HW)

    itemsize = jnp.dtype(output.dtype).itemsize
    with_hm = heatmap is not None
    bt = _choose_batch_tile(N, C, HW, itemsize, with_hm)
    n_blocks = -(-N // bt)
    n_pad = n_blocks * bt
    if n_pad != N:
        # Zero padding contributes exactly 0 to both loss variants (|0-0| = 0),
        # and an all-zero heatmap row softmaxes to a finite uniform weight.
        out_f = jnp.pad(out_f, ((0, n_pad - N), (0, 0), (0, 0)))
        tgt_f = jnp.pad(tgt_f, ((0, n_pad - N), (0, 0), (0, 0)))

    if heatmap is not None:
        assert (H, W) == tuple(size), "output spatial dims must equal `size`"
        # Single-channel heatmap so the PyTorch view(N,-1)->softmax->view(-1,1,H,W)
        # round-trip is shape-preserving.
        assert heatmap.shape[1] == 1, "heatmap must be single-channel"
        # Glue (plain JAX, fused into the same jit region): bilinear with
        # half-pixel centers and NO antialiasing matches
        # F.interpolate(mode='bilinear', align_corners=False).
        hm = jax.image.resize(heatmap.astype(jnp.float32), (N, 1, H, W),
                              method="bilinear", antialias=False)
        hm_f = hm.reshape(N, 1, HW)
        if n_pad != N:
            hm_f = jnp.pad(hm_f, ((0, n_pad - N), (0, 0), (0, 0)))

        loss = pl.pallas_call(
            _weighted_l1_kernel,
            out_shape=jax.ShapeDtypeStruct((1, 1), jnp.float32),
            grid_spec=pltpu.PrefetchScalarGridSpec(
                num_scalar_prefetch=0,
                grid=(n_blocks,),
                in_specs=[
                    pl.BlockSpec((bt, C, HW), lambda i: (i, 0, 0)),
                    pl.BlockSpec((bt, C, HW), lambda i: (i, 0, 0)),
                    pl.BlockSpec((bt, 1, HW), lambda i: (i, 0, 0)),
                ],
                out_specs=pl.BlockSpec((1, 1), lambda i: (0, 0)),
                scratch_shapes=[pltpu.VMEM((1, 1), jnp.float32)],
            ),
            compiler_params=pltpu.CompilerParams(
                dimension_semantics=("arbitrary",)),
        )(out_f, tgt_f, hm_f)
        return loss[0, 0]
    else:
        numel = N * C * H * W
        kernel = functools.partial(_mean_l1_kernel, inv_numel=1.0 / float(numel))
        loss = pl.pallas_call(
            kernel,
            out_shape=jax.ShapeDtypeStruct((1, 1), jnp.float32),
            grid_spec=pltpu.PrefetchScalarGridSpec(
                num_scalar_prefetch=0,
                grid=(n_blocks,),
                in_specs=[
                    pl.BlockSpec((bt, C, HW), lambda i: (i, 0, 0)),
                    pl.BlockSpec((bt, C, HW), lambda i: (i, 0, 0)),
                ],
                out_specs=pl.BlockSpec((1, 1), lambda i: (0, 0)),
                scratch_shapes=[pltpu.VMEM((1, 1), jnp.float32)],
            ),
            compiler_params=pltpu.CompilerParams(
                dimension_semantics=("arbitrary",)),
        )(out_f, tgt_f)
        return loss[0, 0]


if __name__ == "__main__":
    key = jax.random.PRNGKey(0)
    k1, k2, k3 = jax.random.split(key, 3)

    N, C, H, W = 2, 4, 16, 16          # small shapes; module size=(H, W)
    output = jax.random.normal(k1, (N, C, H, W), jnp.float32)
    target = jax.random.normal(k2, (N, C, H, W), jnp.float32)
    heatmap = jax.random.normal(k3, (N, 1, 8, 8), jnp.float32)  # low-res heatmap

    # Keep resize + reshapes + pallas_call in a single jit region.
    weighted_fn = jax.jit(lambda o, t, h: weighted_l1_loss(o, t, h, size=(H, W)))
    mean_fn = jax.jit(lambda o, t: weighted_l1_loss(o, t, None, size=(H, W)))

    loss_weighted = weighted_fn(output, target, heatmap)
    loss_mean = mean_fn(output, target)
    jax.block_until_ready((loss_weighted, loss_mean))

    # Sanity check against a pure-JAX reference of the same math.
    hm = jax.image.resize(heatmap, (N, 1, H, W), method="bilinear",
                          antialias=False)
    sm = jax.nn.softmax(hm.reshape(N, -1), axis=1).reshape(N, 1, H, W)
    ref_weighted = jnp.sum(jnp.abs(output - target) * sm)
    ref_mean = jnp.mean(jnp.abs(output - target))
    assert jnp.allclose(loss_weighted, ref_weighted, rtol=1e-5, atol=1e-5)
    assert jnp.allclose(loss_mean, ref_mean, rtol=1e-5, atol=1e-5)

    print("KERNEL_OK")
</pallas_src>

<mosaic_0001>
module attributes {stable_mosaic.version = 11 : i64} {
  func.func @_weighted_l1_kernel(%arg0: i32, %arg1: memref<2x4x256xf32, #tpu.memory_space<vmem>>, %arg2: memref<2x4x256xf32, #tpu.memory_space<vmem>>, %arg3: memref<2x1x256xf32, #tpu.memory_space<vmem>>, %arg4: memref<1x1xf32, #tpu.memory_space<vmem>>, %arg5: memref<1x1xf32, #tpu.memory_space<vmem>>) attributes {dimension_semantics = [#tpu.dimension_semantics<arbitrary>], iteration_bounds = array<i64: 1>, scalar_prefetch = 0 : i64, scratch_operands = 1 : i64, tpu.core_type = #tpu.core_type<tc>, window_params = [{transform_indices = @transform_0, window_bounds = array<i64: 2, 4, 256>}, {transform_indices = @transform_1, window_bounds = array<i64: 2, 4, 256>}, {transform_indices = @transform_2, window_bounds = array<i64: 2, 1, 256>}, {pipeline_mode = #tpu.pipeline_mode<synchronous>, transform_indices = @transform_3, window_bounds = array<i64: 1, 1>}]} {
    %c0_i32 = arith.constant 0 : i32
    %0 = arith.cmpi eq, %arg0, %c0_i32 : i32
    %1 = arith.extui %0 : i1 to i32
    %c0_i32_0 = arith.constant 0 : i32
    %2 = arith.cmpi ne, %1, %c0_i32_0 : i32
    scf.if %2 {
      %cst_17 = arith.constant 0.000000e+00 : f32
      %31 = vector.broadcast %cst_17 : f32 to vector<1x1xf32>
      %c0_18 = arith.constant 0 : index
      %c0_19 = arith.constant 0 : index
      %32 = vector.load %arg5[%c0_18, %c0_19] : memref<1x1xf32, #tpu.memory_space<vmem>>, vector<1x1xf32>
      tpu.vector_store %arg5[%c0_18, %c0_19], %31 {strides = array<i32>} : memref<1x1xf32, #tpu.memory_space<vmem>>, vector<1x1xf32>,
    } else {
    }
    %c0 = arith.constant 0 : index
    %c0_1 = arith.constant 0 : index
    %c0_2 = arith.constant 0 : index
    %3 = vector.load %arg1[%c0, %c0_1, %c0_2] : memref<2x4x256xf32, #tpu.memory_space<vmem>>, vector<2x4x256xf32>
    %c0_3 = arith.constant 0 : index
    %c0_4 = arith.constant 0 : index
    %c0_5 = arith.constant 0 : index
    %4 = vector.load %arg2[%c0_3, %c0_4, %c0_5] : memref<2x4x256xf32, #tpu.memory_space<vmem>>, vector<2x4x256xf32>
    %c0_6 = arith.constant 0 : index
    %c0_7 = arith.constant 0 : index
    %c0_8 = arith.constant 0 : index
    %5 = vector.load %arg3[%c0_6, %c0_7, %c0_8] : memref<2x1x256xf32, #tpu.memory_space<vmem>>, vector<2x1x256xf32>
    %cst = arith.constant dense<0xFF800000> : vector<2x1xf32>
    %6 = vector.multi_reduction <maximumf>, %5, %cst [2] : vector<2x1x256xf32> to vector<2x1xf32>
    %7 = vector.shape_cast %6 : vector<2x1xf32> to vector<2x1x1xf32>
    %8 = vector.broadcast %7 : vector<2x1x1xf32> to vector<2x1x256xf32>
    %9 = arith.subf %5, %8 : vector<2x1x256xf32>
    %10 = math.exp %9 : vector<2x1x256xf32>
    %cst_9 = arith.constant dense<0.000000e+00> : vector<2x1xf32>
    %11 = vector.multi_reduction <add>, %10, %cst_9 [2] : vector<2x1x256xf32> to vector<2x1xf32>
    %12 = vector.shape_cast %11 : vector<2x1xf32> to vector<2x1x1xf32>
    %13 = tpu.reciprocal %12 : vector<2x1x1xf32> -> vector<2x1x1xf32>
    %14 = vector.broadcast %13 : vector<2x1x1xf32> to vector<2x1x256xf32>
    %15 = arith.mulf %10, %14 : vector<2x1x256xf32>
    %c0_10 = arith.constant 0 : index
    %c0_11 = arith.constant 0 : index
    %16 = vector.load %arg5[%c0_10, %c0_11] : memref<1x1xf32, #tpu.memory_space<vmem>>, vector<1x1xf32>
    %17 = arith.subf %3, %4 : vector<2x4x256xf32>
    %18 = math.absf %17 : vector<2x4x256xf32>
    %19 = vector.broadcast %15 : vector<2x1x256xf32> to vector<2x4x256xf32>
    %20 = arith.mulf %18, %19 : vector<2x4x256xf32>
    %21 = vector.shape_cast %20 : vector<2x4x256xf32> to vector<1x2x4x256xf32>
    %cst_12 = arith.constant dense<0.000000e+00> : vector<1xf32>
    %22 = vector.multi_reduction <add>, %21, %cst_12 [1, 2, 3] : vector<1x2x4x256xf32> to vector<1xf32>
    %23 = vector.shape_cast %22 : vector<1xf32> to vector<1x1x1x1xf32>
    %24 = vector.extract %23[0, 0, 0, 0] : f32 from vector<1x1x1x1xf32>
    %25 = vector.broadcast %24 : f32 to vector<1x1xf32>
    %26 = arith.addf %16, %25 : vector<1x1xf32>
    %c0_13 = arith.constant 0 : index
    %c0_14 = arith.constant 0 : index
    %27 = vector.load %arg5[%c0_13, %c0_14] : memref<1x1xf32, #tpu.memory_space<vmem>>, vector<1x1xf32>
    tpu.vector_store %arg5[%c0_13, %c0_14], %26 {strides = array<i32>} : memref<1x1xf32, #tpu.memory_space<vmem>>, vector<1x1xf32>,
    %c0_i32_15 = arith.constant 0 : i32
    %28 = arith.cmpi eq, %arg0, %c0_i32_15 : i32
    %29 = arith.extui %28 : i1 to i32
    %c0_i32_16 = arith.constant 0 : i32
    %30 = arith.cmpi ne, %29, %c0_i32_16 : i32
    scf.if %30 {
      %c0_17 = arith.constant 0 : index
      %c0_18 = arith.constant 0 : index
      %31 = vector.load %arg5[%c0_17, %c0_18] : memref<1x1xf32, #tpu.memory_space<vmem>>, vector<1x1xf32>
      %c0_19 = arith.constant 0 : index
      %c0_20 = arith.constant 0 : index
      %32 = vector.load %arg4[%c0_19, %c0_20] : memref<1x1xf32, #tpu.memory_space<vmem>>, vector<1x1xf32>
      tpu.vector_store %arg4[%c0_19, %c0_20], %31 {strides = array<i32>} : memref<1x1xf32, #tpu.memory_space<vmem>>, vector<1x1xf32>,
    } else {
    }
    return
  }
  func.func @transform_0(%arg0: i32) -> (i32, i32, i32) {
    %c0_i32 = arith.constant 0 : i32
    %c0_i32_0 = arith.constant 0 : i32
    %c0_i32_1 = arith.constant 0 : i32
    return %arg0, %c0_i32, %c0_i32_0 : i32, i32, i32
  }
  func.func @transform_1(%arg0: i32) -> (i32, i32, i32) {
    %c0_i32 = arith.constant 0 : i32
    %c0_i32_0 = arith.constant 0 : i32
    %c0_i32_1 = arith.constant 0 : i32
    return %arg0, %c0_i32, %c0_i32_0 : i32, i32, i32
  }
  func.func @transform_2(%arg0: i32) -> (i32, i32, i32) {
    %c0_i32 = arith.constant 0 : i32
    %c0_i32_0 = arith.constant 0 : i32
    %c0_i32_1 = arith.constant 0 : i32
    return %arg0, %c0_i32, %c0_i32_0 : i32, i32, i32
  }
  func.func @transform_3(%arg0: i32) -> (i32, i32) {
    %c0_i32 = arith.constant 0 : i32
    %c0_i32_0 = arith.constant 0 : i32
    %c0_i32_1 = arith.constant 0 : i32
    return %c0_i32, %c0_i32_0 : i32, i32
  }
}

</mosaic_0001>

<llo_original>
// kernel: _lambda_.1
$region0: #{_lambda_.1}
  #allocation0 [shape = 'u32[]', space=smem, size = 0x4, offset = 0x4, fixed_abs, tag = 'smem constant byte address 0x4 - core index']
  #allocation1 [shape = 'u32[144,128]{1,0:T(1,128)}', space=vmem, size = 0x12000, scoped, tag = 'internal scratch']
  #allocation2 [shape = 'f32[1,1]{1,0:T(1,128)}', space=vmem, size = 0x200, scoped, tag = 'scratch operand']
  %s0 = inlined_call_operand.vmem [shape: f32[2,4,256], index: 0, kind: input, shape index: {}]
  %s1 = inlined_call_operand.vmem [shape: f32[2,4,256], index: 1, kind: input, shape index: {}]
  %s2 = inlined_call_operand.vmem [shape: f32[2,1,256], index: 2, kind: input, shape index: {}]
  %s3 = inlined_call_operand.hbm [shape: f32[1,1], index: 3, kind: output, shape index: {}]
  %s4 = sld [smem:[#allocation0]]
  $region30: #{_lambda_.1} parent=0
    _
  %s6 = ssub.s32 1, %s4
  %s7 = scalar_select 0, %s6, %s4
  $region1: #{_lambda_.1} parent=0
    #allocation3 [shape = 'u8[512]{0}', space=vmem, size = 0x400, scoped, tag = 'output window, operand 0, single buffered']
    #allocation4 [shape = 's32[1]{0}', space=sflag, size = 0x4, scoped, tag = 'scoped memory for _lambda_.1']
    %8 = vsyncpa [#allocation4], 0
    // Predicated region
    $region2: #{_lambda_.1} parent=1 // pred_check
      _
    $region3: #{_lambda_.1} parent=1 // pred_check_branch
      %10 = sbr.rel (0) target = $region5
    $region4: #{_lambda_.1} parent=1 // pred_region
      _
    $region5: #{_lambda_.1} parent=1 // pred_fallthru
      _
    // Predicated region
    $region6: #{_lambda_.1} parent=1 // pred_check
      _
    $region7: #{_lambda_.1} parent=1 // pred_check_branch
      %12 = sbr.rel (0) target = $region9
    $region8: #{_lambda_.1} parent=1 // pred_region
      _
    $region9: #{_lambda_.1} parent=1 // pred_fallthru
      _
    // Predicated region
    $region10: #{_lambda_.1} parent=1 // pred_check
      _
    $region11: #{_lambda_.1} parent=1 // pred_check_branch
      %14 = sbr.rel (0) target = $region13
    $region12: #{_lambda_.1} parent=1 // pred_region
      _
    $region13: #{_lambda_.1} parent=1 // pred_fallthru
      _
    %p15 = scmp.eq.s32.totalorder 0, 0
    // Predicated region
    $region14: #{_lambda_.1} parent=1 // pred_check
      %p16 = pneg %p15
    $region15: #{_lambda_.1} parent=1 // pred_check_branch
      %18 = sbr.rel (%p16) target = $region17
    $region16: #{_lambda_.1} parent=1 // pred_region
      %vm19 = vcmask 0
      %20 = vst.msk [vmem:[#allocation2] sm:$0x1] %vm19, 0.0
    $region17: #{_lambda_.1} parent=1 // pred_fallthru
      _
    %v21 = vld [vmem:[%s0] sm:$0xff]
    %v22 = vld [vmem:[%s0 + $0x8] sm:$0xff]
    %v23 = vld [vmem:[%s1] sm:$0xff]
    %v24 = vld [vmem:[%s1 + $0x8] sm:$0xff]
    %v25 = vld [vmem:[%s2] sm:$0x3]
    %v26 = vld [vmem:[%s2 + $0x2] sm:$0x3]
    %v29 = vlaneseq
    %v30 = vshrl.u32 %v29, 7
    %v31 = vsub.s32 0, %v30
    %v32 = vrot.slane %v25, %v31
    %v33 = vlaneseq
    %v34 = vshrl.u32 %v33, 7
    %v35 = vsub.s32 1, %v34
    %v36 = vrot.slane %v25, %v35
    %v37 = vlaneseq
    %v38 = vshrl.u32 %v37, 7
    %v39 = vsub.s32 0, %v38
    %v40 = vrot.slane %v26, %v39
    %v41 = vlaneseq
    %v42 = vshrl.u32 %v41, 7
    %v43 = vsub.s32 1, %v42
    %v44 = vrot.slane %v26, %v43
    %vm49 = vcmask 1040384
    %v50 = vsel %vm49, %v32, -inf
    %v51 = vsel %vm49, %v36, -inf
    %v52 = vmax.f32 %v50, %v51
    %53 = vmax.xlane.f32.xlu0 %v52
    %v54 = vpop.xlane.xlu0 %53
    %v55 = vsel %vm49, %v40, -inf
    %v56 = vsel %vm49, %v44, -inf
    %v57 = vmax.f32 %v55, %v56
    %58 = vmax.xlane.f32.xlu0 %v57
    %v59 = vpop.xlane.xlu0 %58
    %v62 = vlaneseq
    %v63 = vshrl.u32 %v62, 7
    %v64 = vsub.s32 0, %v63
    %v65 = vrot.slane %v54, %v64
    %v66 = vlaneseq
    %v67 = vshrl.u32 %v66, 7
    %v68 = vsub.s32 0, %v67
    %v69 = vrot.slane %v59, %v68
    %v72 = vsub.f32 %v25, %v65
    %v73 = vsub.f32 %v26, %v69
    %v74 = vmul.f32 %v72, 1.442695
    %v75 = vpow.pop %v74
    %v76 = vmul.f32 %v73, 1.442695
    %v77 = vpow.pop %v76
    %v80 = vlaneseq
    %v81 = vshrl.u32 %v80, 7
    %v82 = vsub.s32 0, %v81
    %v83 = vrot.slane %v75, %v82
    %v84 = vlaneseq
    %v85 = vshrl.u32 %v84, 7
    %v86 = vsub.s32 1, %v85
    %v87 = vrot.slane %v75, %v86
    %v88 = vlaneseq
    %v89 = vshrl.u32 %v88, 7
    %v90 = vsub.s32 0, %v89
    %v91 = vrot.slane %v77, %v90
    %v92 = vlaneseq
    %v93 = vshrl.u32 %v92, 7
    %v94 = vsub.s32 1, %v93
    %v95 = vrot.slane %v77, %v94
    %v100 = vsel %vm49, %v83, 0.0
    %v101 = vsel %vm49, %v87, 0.0
    %v102 = vadd.f32 %v100, %v101
    %103 = vadd.xlane.f32.xlu0 %v102
    %v104 = vpop.xlane.xlu0 %103
    %v105 = vsel %vm49, %v91, 0.0
    %v106 = vsel %vm49, %v95, 0.0
    %v107 = vadd.f32 %v105, %v106
    %108 = vadd.xlane.f32.xlu0 %v107
    %v109 = vpop.xlane.xlu0 %108
    %v110 = vrcp.pop %v104
    %v111 = vrcp.pop %v109
    %v114 = vlaneseq
    %v115 = vshrl.u32 %v114, 7
    %v116 = vsub.s32 0, %v115
    %v117 = vrot.slane %v110, %v116
    %v118 = vlaneseq
    %v119 = vshrl.u32 %v118, 7
    %v120 = vsub.s32 0, %v119
    %v121 = vrot.slane %v111, %v120
    %v124 = vmul.f32 %v75, %v117
    %v125 = vmul.f32 %v77, %v121
    %v126 = vld [vmem:[#allocation2] sm:$0x1]
    %v127 = vsub.f32 %v21, %v23
    %v128 = vsub.f32 %v22, %v24
    %v129 = vand.u32 2147483647, %v127
    %v130 = vand.u32 2147483647, %v128
    %v133 = vlaneseq
    %v134 = vshrl.u32 %v133, 7
    %v135 = vsub.s32 0, %v134
    %v136 = vrot.slane %v124, %v135
    %v137 = vlaneseq
    %v138 = vshrl.u32 %v137, 7
    %v139 = vsub.s32 1, %v138
    %v140 = vrot.slane %v124, %v139
    %v141 = vlaneseq
    %v142 = vshrl.u32 %v141, 7
    %v143 = vsub.s32 0, %v142
    %v144 = vrot.slane %v125, %v143
    %v145 = vlaneseq
    %v146 = vshrl.u32 %v145, 7
    %v147 = vsub.s32 1, %v146
    %v148 = vrot.slane %v125, %v147
    %v149 = vcombine.low %v136, %v140
    %v150 = vcombine.low %v144, %v148
    %v153 = vmul.f32 %v129, %v149
    %v154 = vmul.f32 %v130, %v150
    %v157 = vcombine.high %v153, %v153
    %v158 = vcombine.high %v154, %v154
    %vm161 = vcmask 1043456
    %v162 = vsel %vm161, %v153, 0.0
    %v163 = vsel %vm161, %v157, 0.0
    %v164 = vadd.f32 %v162, %v163
    %v165 = vsel %vm161, %v154, 0.0
    %v166 = vadd.f32 %v164, %v165
    %v167 = vsel %vm161, %v158, 0.0
    %v168 = vadd.f32 %v166, %v167
    %169 = vadd.xlane.f32.xlu0 %v168
    %v170 = vpop.xlane.xlu0 %169
    %v171 = vrot.slane %v170, 4
    %v172 = vadd.f32 %v170, %v171
    %v173 = vrot.slane %v172, 2
    %v174 = vadd.f32 %v172, %v173
    %v175 = vrot.slane %v174, 1
    %v176 = vadd.f32 %v174, %v175
    %s177 = vtos %v176
    %v178 = vstv %s177
    %v179 = vadd.f32 %v126, %v178
    %vm180 = vcmask 0
    %181 = vst.msk [vmem:[#allocation2] sm:$0x1] %vm180, %v179
    // Predicated region
    $region18: #{_lambda_.1} parent=1 // pred_check
      %p182 = pneg %p15
    $region19: #{_lambda_.1} parent=1 // pred_check_branch
      %184 = sbr.rel (%p182) target = $region21
    $region20: #{_lambda_.1} parent=1 // pred_region
      %v185 = vld [vmem:[#allocation2] sm:$0x1]
      %186 = vst.msk [vmem:[#allocation3] sm:$0x1] %vm180, %v185
    $region21: #{_lambda_.1} parent=1 // pred_fallthru
      _
    // Predicated region
    $region22: #{_lambda_.1} parent=1 // pred_check
      _
    $region23: #{_lambda_.1} parent=1 // pred_check_branch
      %188 = sbr.rel (0) target = $region25
    $region24: #{_lambda_.1} parent=1 // pred_region
      %s190 = ssub.s32 16, 16
      %191 = vsyncadd [#allocation4], %s190
      %s193 = sshll.u32 [#allocation3], 4
      %s194 = int_to_ptr.vmem [resolvable:$true] %s193
      %196 = dma.vmem_to_hbm [thread:$0]  %s194, 16, %s3, [#allocation4]
    $region25: #{_lambda_.1} parent=1 // pred_fallthru
      _
    // Predicated region
    $region26: #{_lambda_.1} parent=1 // pred_check
      _
    $region27: #{_lambda_.1} parent=1 // pred_check_branch
      %198 = sbr.rel (0) target = $region29
    $region28: #{_lambda_.1} parent=1 // pred_region
      %199 = dma.done [#allocation4], 16
    $region29: #{_lambda_.1} parent=1 // pred_fallthru
      _
    %200 = vsyncpa [#allocation4], 1

</llo_original>
